<compile_context>
chip_gen: v7x
topology: tpu7x:2x2x1
jax: 0.10.0
libtpu: 0.0.40
codegen_flags: <defaults>
</compile_context>

<pallas_src>
import functools

import jax
import jax.numpy as jnp
from jax import lax
from jax.experimental import pallas as pl
from jax.experimental.pallas import tpu as pltpu


def od_encoder_kernel(idx_ref, off_ref, w_ref, out_ref, *, seg_num, d2):
    """idx_ref: (TB, 2) int32 [src, dest]; off_ref: (TB, 2) f32 (= offset[:,1:3]);
    w_ref: (2*seg_num, OUT_PAD) zero-padded block-diag table;
    out_ref: (TB, OUT_PAD) f32."""
    TB = idx_ref.shape[0]
    two_seg = w_ref.shape[0]              # 2 * seg_num
    out_pad = out_ref.shape[1]

    idx = idx_ref[...]                    # (TB, 2) int32
    src = idx[:, 0:1]                     # (TB, 1)
    dest = idx[:, 1:2]                    # (TB, 1)

    # Single fused one-hot over 2*seg_num lanes:
    #   lanes [0, seg_num)         match src
    #   lanes [seg_num, 2*seg_num) match dest (shifted by seg_num)
    # src/dest < seg_num, so a plain OR of the two equalities is exact.
    lane = lax.broadcasted_iota(jnp.int32, (TB, two_seg), 1)
    onehot = ((lane == src) | (lane == (dest + seg_num))).astype(jnp.float32)

    # One MXU matmul yields [emb_o | emb_d | 0...] over the full padded width.
    emb = jnp.dot(
        onehot,
        w_ref[...],
        preferred_element_type=jnp.float32,
        precision=lax.Precision.HIGHEST,
    )                                     # (TB, out_pad); lanes >= d2 are zero

    # Inject the two offset columns at lanes [d2, d2+2) via lane selects, then
    # emit exactly one unmasked, lane-dense store of the whole block.
    olane = lax.broadcasted_iota(jnp.int32, (TB, out_pad), 1)
    off = off_ref[...]                    # (TB, 2) f32
    off_slab = jnp.where(
        olane == d2, off[:, 0:1],
        jnp.where(olane == d2 + 1, off[:, 1:2], jnp.float32(0.0)),
    )
    out_ref[...] = (emb + off_slab).astype(out_ref.dtype)


def od_encoder(src, dest, offset, w_feat, w_dest):
    """Pallas implementation of ODEncoder.forward (use_offset=True)."""
    B = src.shape[0]
    seg_num, d_seg = w_feat.shape
    d2 = 2 * d_seg
    out_dim = d2 + 2
    OUT_PAD = ((out_dim + 127) // 128) * 128      # lane-dense output width

    # Batch tile: multiple of 8, capped so VMEM stays comfortable on v7x too.
    TB = min(512, ((B + 7) // 8) * 8)
    n_tiles = pl.cdiv(B, TB)
    B_pad = n_tiles * TB

    # Pack the two index vectors into one (B, 2) int32 input (fewer DMAs).
    idx = jnp.stack([src.astype(jnp.int32), dest.astype(jnp.int32)], axis=1)
    # Pre-slice offset to the two used columns (no unused bytes shipped).
    off2 = offset[:, 1:3].astype(jnp.float32)

    if B_pad != B:
        idx = jnp.pad(idx, ((0, B_pad - B), (0, 0)))
        off2 = jnp.pad(off2, ((0, B_pad - B), (0, 0)))

    # Block-diagonal fused embedding table, zero-padded on the lane axis to
    # OUT_PAD: (2*seg_num, OUT_PAD).  Precomputed once in the wrapper
    # (weight prep, amortized across calls).
    zeros = jnp.zeros((seg_num, d_seg), jnp.float32)
    w_blk = jnp.block(
        [[w_feat.astype(jnp.float32), zeros],
         [zeros, w_dest.astype(jnp.float32)]]
    )
    if OUT_PAD != d2:
        w_blk = jnp.pad(w_blk, ((0, 0), (0, OUT_PAD - d2)))

    cost = pl.CostEstimate(
        flops=2 * B_pad * (2 * seg_num) * OUT_PAD,
        transcendentals=0,
        bytes_accessed=(w_blk.size * 4 + idx.size * 4 + off2.size * 4
                        + B_pad * OUT_PAD * 4),
    )

    kernel = functools.partial(od_encoder_kernel, seg_num=seg_num, d2=d2)

    out = pl.pallas_call(
        kernel,
        out_shape=jax.ShapeDtypeStruct((B_pad, OUT_PAD), jnp.float32),
        grid=(n_tiles,),
        in_specs=[
            pl.BlockSpec((TB, 2), lambda i: (i, 0)),                 # packed indices
            pl.BlockSpec((TB, 2), lambda i: (i, 0)),                 # offset[:, 1:3]
            pl.BlockSpec((2 * seg_num, OUT_PAD), lambda i: (0, 0)),  # padded block-diag table
            # NOTE: for production-sized tables on v7x (64 MiB VMEM), switch this
            # spec to a scalar-prefetch row gather instead of keeping the whole
            # (padded) table resident in VMEM.
        ],
        out_specs=pl.BlockSpec((TB, OUT_PAD), lambda i: (i, 0)),
        compiler_params=pltpu.CompilerParams(
            dimension_semantics=("parallel",)),                      # 2 TCs on v7x
        cost_estimate=cost,
    )(idx, off2, w_blk)

    return out[:B, :out_dim]


if __name__ == "__main__":
    # Small, module-consistent hparams: seg_num=64, d_seg=32, batch=8, offset has 4 cols.
    B, seg_num, d_seg, d_off = 8, 64, 32, 4

    key = jax.random.PRNGKey(0)
    k_feat, k_dest, k_src, k_dst, k_off = jax.random.split(key, 5)

    # nn.Embedding default init ~ N(0, 1)
    w_feat = jax.random.normal(k_feat, (seg_num, d_seg), dtype=jnp.float32)
    w_dest = jax.random.normal(k_dest, (seg_num, d_seg), dtype=jnp.float32)

    src = jax.random.randint(k_src, (B,), 0, seg_num, dtype=jnp.int32)
    dest = jax.random.randint(k_dst, (B,), 0, seg_num, dtype=jnp.int32)
    offset = jax.random.normal(k_off, (B, d_off), dtype=jnp.float32)

    code = od_encoder(src, dest, offset, w_feat, w_dest)
    code = jax.block_until_ready(code)

    # Pure-JAX reference for correctness.
    ref = jnp.concatenate([w_feat[src], w_dest[dest], offset[:, 1:3]], axis=1)
    assert code.shape == (B, 2 * d_seg + 2)
    assert jnp.allclose(code, ref, atol=1e-5, rtol=1e-5)

    print("KERNEL_OK")
</pallas_src>

<mosaic_0001>
module attributes {stable_mosaic.version = 11 : i64} {
  func.func @od_encoder_kernel(%arg0: i32, %arg1: memref<8x2xi32, #tpu.memory_space<vmem>>, %arg2: memref<8x2xf32, #tpu.memory_space<vmem>>, %arg3: memref<128x128xf32, #tpu.memory_space<vmem>>, %arg4: memref<8x128xf32, #tpu.memory_space<vmem>>) attributes {dimension_semantics = [#tpu.dimension_semantics<parallel>], iteration_bounds = array<i64: 1>, scalar_prefetch = 0 : i64, scratch_operands = 0 : i64, tpu.core_type = #tpu.core_type<tc>, window_params = [{transform_indices = @transform_0, window_bounds = array<i64: 8, 2>}, {transform_indices = @transform_1, window_bounds = array<i64: 8, 2>}, {pipeline_mode = #tpu.pipeline_mode<synchronous>, transform_indices = @transform_2, window_bounds = array<i64: 128, 128>}, {transform_indices = @transform_3, window_bounds = array<i64: 8, 128>}]} {
    %c0 = arith.constant 0 : index
    %c0_0 = arith.constant 0 : index
    %0 = vector.load %arg1[%c0, %c0_0] : memref<8x2xi32, #tpu.memory_space<vmem>>, vector<8x2xi32>
    %1 = vector.extract_strided_slice %0 {offsets = [0, 0], sizes = [8, 1], strides = [1, 1]} : vector<8x2xi32> to vector<8x1xi32>
    %2 = vector.extract_strided_slice %0 {offsets = [0, 1], sizes = [8, 1], strides = [1, 1]} : vector<8x2xi32> to vector<8x1xi32>
    %3 = tpu.iota {dimensions = array<i32: 1>} : vector<8x128xi32>
    %4 = vector.broadcast %1 : vector<8x1xi32> to vector<8x128xi32>
    %5 = arith.cmpi eq, %3, %4 : vector<8x128xi32>
    %c64_i32 = arith.constant 64 : i32
    %6 = vector.broadcast %c64_i32 : i32 to vector<8x1xi32>
    %7 = arith.addi %2, %6 : vector<8x1xi32>
    %8 = vector.broadcast %7 : vector<8x1xi32> to vector<8x128xi32>
    %9 = arith.cmpi eq, %3, %8 : vector<8x128xi32>
    %10 = arith.ori %5, %9 : vector<8x128xi1>
    %11 = arith.extui %10 : vector<8x128xi1> to vector<8x128xi32>
    %12 = arith.sitofp %11 : vector<8x128xi32> to vector<8x128xf32>
    %c0_1 = arith.constant 0 : index
    %c0_2 = arith.constant 0 : index
    %13 = vector.load %arg3[%c0_1, %c0_2] : memref<128x128xf32, #tpu.memory_space<vmem>>, vector<128x128xf32>
    %cst = arith.constant dense<0.000000e+00> : vector<8x128xf32>
    %14 = tpu.matmul %12, %13, %cst {dimension_numbers = #tpu.dot_dimension_numbers<[1], [0], [0], [1], [0, 0, 1, 1], [], []>, precision = #tpu.contract_precision<fp32>} : vector<8x128xf32>, vector<128x128xf32>, vector<8x128xf32> -> vector<8x128xf32>
    %15 = tpu.iota {dimensions = array<i32: 1>} : vector<8x128xi32>
    %c0_3 = arith.constant 0 : index
    %c0_4 = arith.constant 0 : index
    %16 = vector.load %arg2[%c0_3, %c0_4] : memref<8x2xf32, #tpu.memory_space<vmem>>, vector<8x2xf32>
    %c64_i32_5 = arith.constant 64 : i32
    %17 = vector.broadcast %c64_i32_5 : i32 to vector<8x128xi32>
    %18 = arith.cmpi eq, %15, %17 : vector<8x128xi32>
    %19 = vector.extract_strided_slice %16 {offsets = [0, 0], sizes = [8, 1], strides = [1, 1]} : vector<8x2xf32> to vector<8x1xf32>
    %c65_i32 = arith.constant 65 : i32
    %20 = vector.broadcast %c65_i32 : i32 to vector<8x128xi32>
    %21 = arith.cmpi eq, %15, %20 : vector<8x128xi32>
    %22 = vector.extract_strided_slice %16 {offsets = [0, 1], sizes = [8, 1], strides = [1, 1]} : vector<8x2xf32> to vector<8x1xf32>
    %cst_6 = arith.constant 0.000000e+00 : f32
    %23 = vector.shape_cast %22 : vector<8x1xf32> to vector<8x1xf32>
    %24 = vector.broadcast %23 : vector<8x1xf32> to vector<8x128xf32>
    %25 = vector.broadcast %cst_6 : f32 to vector<8x128xf32>
    %26 = arith.select %21, %24, %25 : vector<8x128xi1>, vector<8x128xf32>
    %27 = vector.shape_cast %19 : vector<8x1xf32> to vector<8x1xf32>
    %28 = vector.broadcast %27 : vector<8x1xf32> to vector<8x128xf32>
    %29 = arith.select %18, %28, %26 : vector<8x128xi1>, vector<8x128xf32>
    %30 = arith.addf %14, %29 : vector<8x128xf32>
    %c0_7 = arith.constant 0 : index
    %c0_8 = arith.constant 0 : index
    %31 = vector.load %arg4[%c0_7, %c0_8] : memref<8x128xf32, #tpu.memory_space<vmem>>, vector<8x128xf32>
    tpu.vector_store %arg4[%c0_7, %c0_8], %30 {strides = array<i32>} : memref<8x128xf32, #tpu.memory_space<vmem>>, vector<8x128xf32>,
    return
  }
  func.func @transform_0(%arg0: i32) -> (i32, i32) {
    %c0_i32 = arith.constant 0 : i32
    %c0_i32_0 = arith.constant 0 : i32
    return %arg0, %c0_i32 : i32, i32
  }
  func.func @transform_1(%arg0: i32) -> (i32, i32) {
    %c0_i32 = arith.constant 0 : i32
    %c0_i32_0 = arith.constant 0 : i32
    return %arg0, %c0_i32 : i32, i32
  }
  func.func @transform_2(%arg0: i32) -> (i32, i32) {
    %c0_i32 = arith.constant 0 : i32
    %c0_i32_0 = arith.constant 0 : i32
    %c0_i32_1 = arith.constant 0 : i32
    return %c0_i32, %c0_i32_0 : i32, i32
  }
  func.func @transform_3(%arg0: i32) -> (i32, i32) {
    %c0_i32 = arith.constant 0 : i32
    %c0_i32_0 = arith.constant 0 : i32
    return %arg0, %c0_i32 : i32, i32
  }
}

</mosaic_0001>

<llo_original>
// kernel: tpu_custom_call.1
$region0: #{tpu_custom_call.1}
  #allocation0 [shape = 'u32[]', space=smem, size = 0x4, offset = 0x4, fixed_abs, tag = 'smem constant byte address 0x4 - core index']
  #allocation1 [shape = 'u32[144,128]{1,0:T(1,128)}', space=vmem, size = 0x12000, scoped, tag = 'internal scratch']
  %s0 = inlined_call_operand.vmem [shape: s32[8,2], index: 0, kind: input, shape index: {}]
  %s1 = inlined_call_operand.vmem [shape: f32[8,2], index: 1, kind: input, shape index: {}]
  %s2 = inlined_call_operand.hbm [shape: f32[128,128], index: 2, kind: input, shape index: {}]
  %s3 = inlined_call_operand.hbm [shape: f32[8,128], index: 3, kind: output, shape index: {}]
  %s4 = sld [smem:[#allocation0]]
  $region26: #{tpu_custom_call.1} parent=0
    _
  %s6 = ssub.s32 1, %s4
  %s7 = scalar_select 0, %s6, %s4
  $region1: #{tpu_custom_call.1} parent=0
    #allocation2 [shape = 'u8[65536]{0}', space=vmem, size = 0x10000, scoped, tag = 'input window, operand 2, single buffered']
    #allocation3 [shape = 's32[1]{0}', space=sflag, size = 0x4, scoped, tag = 'scoped memory for tpu_custom_call.1']
    #allocation4 [shape = 's32[1]{0}', space=sflag, size = 0x4, scoped, tag = 'scoped memory for tpu_custom_call.1']
    #allocation5 [shape = 'u8[4096]{0}', space=vmem, size = 0x1000, scoped, tag = 'output window, operand 0, single buffered']
    %8 = vsyncpa [#allocation3], 0
    %9 = vsyncpa [#allocation4], 0
    // Predicated region
    $region2: #{tpu_custom_call.1} parent=1 // pred_check
      _
    $region3: #{tpu_custom_call.1} parent=1 // pred_check_branch
      %11 = sbr.rel (0) target = $region5
    $region4: #{tpu_custom_call.1} parent=1 // pred_region
      _
    $region5: #{tpu_custom_call.1} parent=1 // pred_fallthru
      _
    // Predicated region
    $region6: #{tpu_custom_call.1} parent=1 // pred_check
      _
    $region7: #{tpu_custom_call.1} parent=1 // pred_check_branch
      %13 = sbr.rel (0) target = $region9
    $region8: #{tpu_custom_call.1} parent=1 // pred_region
      _
    $region9: #{tpu_custom_call.1} parent=1 // pred_fallthru
      _
    // Predicated region
    $region10: #{tpu_custom_call.1} parent=1 // pred_check
      _
    $region11: #{tpu_custom_call.1} parent=1 // pred_check_branch
      %15 = sbr.rel (0) target = $region13
    $region12: #{tpu_custom_call.1} parent=1 // pred_region
      %s17 = ssub.s32 2048, 2048
      %18 = vsyncadd [#allocation3], %s17
      %s19 = sshll.u32 [#allocation2], 4
      %s20 = int_to_ptr.vmem [resolvable:$true] %s19
      %25 = dma.hbm_to_vmem [thread:$0]  %s2, 2048, %s20, [#allocation3], 128, 128, 8
    $region13: #{tpu_custom_call.1} parent=1 // pred_fallthru
      _
    // Predicated region
    $region14: #{tpu_custom_call.1} parent=1 // pred_check
      _
    $region15: #{tpu_custom_call.1} parent=1 // pred_check_branch
      %27 = sbr.rel (0) target = $region17
    $region16: #{tpu_custom_call.1} parent=1 // pred_region
      %28 = dma.done [#allocation3], 2048
    $region17: #{tpu_custom_call.1} parent=1 // pred_fallthru
      _
    %v29 = vld [vmem:[%s0] sm:$0xff]
    %v30 = vlaneseq
    %v31 = vand.u32 %v30, 127
    %32 = vset.pattern.permute.xlu0 0
    %33 = vperm.xlu0 %32, %v29
    %v34 = vpop.permute.xlu0 %33
    %vm35 = vcmp.eq.s32.totalorder %v31, %v34
    %v36 = vadd.s32 %v29, 64
    %37 = vset.pattern.permute.xlu0 1
    %38 = vperm.xlu0 %37, %v36
    %v39 = vpop.permute.xlu0 %38
    %vm40 = vcmp.eq.s32.totalorder %v31, %v39
    %vm41 = vmor %vm35, %vm40
    %v42 = vsel %vm41, 1, 0
    %v43 = vcvt.s32.f32 %v42
    %v44 = vld [vmem:[#allocation2] sm:$0xff]
    %v45 = vld [vmem:[#allocation2 + $0x8] sm:$0xff]
    %v46 = vld [vmem:[#allocation2 + $0x10] sm:$0xff]
    %v47 = vld [vmem:[#allocation2 + $0x18] sm:$0xff]
    %v48 = vld [vmem:[#allocation2 + $0x20] sm:$0xff]
    %v49 = vld [vmem:[#allocation2 + $0x28] sm:$0xff]
    %v50 = vld [vmem:[#allocation2 + $0x30] sm:$0xff]
    %v51 = vld [vmem:[#allocation2 + $0x38] sm:$0xff]
    %v52 = vld [vmem:[#allocation2 + $0x40] sm:$0xff]
    %v53 = vld [vmem:[#allocation2 + $0x48] sm:$0xff]
    %v54 = vld [vmem:[#allocation2 + $0x50] sm:$0xff]
    %v55 = vld [vmem:[#allocation2 + $0x58] sm:$0xff]
    %v56 = vld [vmem:[#allocation2 + $0x60] sm:$0xff]
    %v57 = vld [vmem:[#allocation2 + $0x68] sm:$0xff]
    %v58 = vld [vmem:[#allocation2 + $0x70] sm:$0xff]
    %v59 = vld [vmem:[#allocation2 + $0x78] sm:$0xff]
    %v60 = vld [vmem:[%s1] sm:$0xff]
    %vm61 = vcmp.eq.s32.totalorder %v31, 64
    %vm62 = vcmp.eq.s32.totalorder %v31, 65
    %64 = vset.pattern.permute.xlu0 1
    %65 = vperm.xlu0 %64, %v60
    %v66 = vpop.permute.xlu0 %65
    %v68 = vsel %vm62, %v66, 0.0
    %69 = vset.pattern.permute.xlu0 0
    %70 = vperm.xlu0 %69, %v60
    %v71 = vpop.permute.xlu0 %70
    %v73 = vsel %vm61, %v71, %v68
    %74 = vmatprep.subr.mxu0 0.0
    %v75 = vand.u32 %v44, 4294901760
    %76 = vmatpush1.msra.mxu0 %v75
    %77 = vmatprep.subr.mxu0 0.0
    %v78 = vand.u32 %v45, 4294901760
    %79 = vmatpush1.msra.mxu0 %v78
    %80 = vmatprep.subr.mxu0 0.0
    %v81 = vand.u32 %v46, 4294901760
    %82 = vmatpush1.msra.mxu0 %v81
    %83 = vmatprep.subr.mxu0 0.0
    %v84 = vand.u32 %v47, 4294901760
    %85 = vmatpush1.msra.mxu0 %v84
    %86 = vmatprep.subr.mxu0 0.0
    %v87 = vand.u32 %v48, 4294901760
    %88 = vmatpush1.msra.mxu0 %v87
    %89 = vmatprep.subr.mxu0 0.0
    %v90 = vand.u32 %v49, 4294901760
    %91 = vmatpush1.msra.mxu0 %v90
    %92 = vmatprep.subr.mxu0 0.0
    %v93 = vand.u32 %v50, 4294901760
    %94 = vmatpush1.msra.mxu0 %v93
    %95 = vmatprep.subr.mxu0 0.0
    %v96 = vand.u32 %v51, 4294901760
    %97 = vmatpush1.msra.mxu0 %v96
    %98 = vmatprep.subr.mxu0 0.0
    %v99 = vand.u32 %v52, 4294901760
    %100 = vmatpush1.msra.mxu0 %v99
    %101 = vmatprep.subr.mxu0 0.0
    %v102 = vand.u32 %v53, 4294901760
    %103 = vmatpush1.msra.mxu0 %v102
    %104 = vmatprep.subr.mxu0 0.0
    %v105 = vand.u32 %v54, 4294901760
    %106 = vmatpush1.msra.mxu0 %v105
    %107 = vmatprep.subr.mxu0 0.0
    %v108 = vand.u32 %v55, 4294901760
    %109 = vmatpush1.msra.mxu0 %v108
    %110 = vmatprep.subr.mxu0 0.0
    %v111 = vand.u32 %v56, 4294901760
    %112 = vmatpush1.msra.mxu0 %v111
    %113 = vmatprep.subr.mxu0 0.0
    %v114 = vand.u32 %v57, 4294901760
    %115 = vmatpush1.msra.mxu0 %v114
    %116 = vmatprep.subr.mxu0 0.0
    %v117 = vand.u32 %v58, 4294901760
    %118 = vmatpush1.msra.mxu0 %v117
    %119 = vmatprep.subr.mxu0 0.0
    %v120 = vand.u32 %v59, 4294901760
    %121 = vmatpush1.msra.mxu0 %v120
    %122 = vmatprep.subr.mxu0 0.0
    %123 = vmatpush1.msra.mxu0 0.0
    %124 = vmatprep.subr.mxu0 0.0
    %125 = vmatpush1.msra.mxu0 0.0
    %126 = vmatprep.subr.mxu0 0.0
    %127 = vmatpush1.msra.mxu0 0.0
    %128 = vmatprep.subr.mxu0 0.0
    %129 = vmatpush1.msra.mxu0 0.0
    %130 = vmatprep.subr.mxu0 0.0
    %131 = vmatpush1.msra.mxu0 0.0
    %132 = vmatprep.subr.mxu0 0.0
    %133 = vmatpush1.msra.mxu0 0.0
    %134 = vmatprep.subr.mxu0 0.0
    %135 = vmatpush1.msra.mxu0 0.0
    %136 = vmatprep.subr.mxu0 0.0
    %137 = vmatpush1.msra.mxu0 0.0
    %138 = vmatprep.subr.mxu0 0.0
    %139 = vmatpush1.msra.mxu0 0.0
    %140 = vmatprep.subr.mxu0 0.0
    %141 = vmatpush1.msra.mxu0 0.0
    %142 = vmatprep.subr.mxu0 0.0
    %143 = vmatpush1.msra.mxu0 0.0
    %144 = vmatprep.subr.mxu0 0.0
    %145 = vmatpush1.msra.mxu0 0.0
    %146 = vmatprep.subr.mxu0 0.0
    %147 = vmatpush1.msra.mxu0 0.0
    %148 = vmatprep.subr.mxu0 0.0
    %149 = vmatpush1.msra.mxu0 0.0
    %150 = vmatprep.subr.mxu0 0.0
    %151 = vmatpush1.msra.mxu0 0.0
    %152 = vmatprep.subr.mxu0 0.0
    %153 = vmatpush1.msra.mxu0 0.0
    %154 = vmatprep.mubr.f32.mxu0 0.0
    %v155 = vand.u32 %v43, 4294901760
    %v156 = vsub.f32 %v43, %v155
    %v157 = vand.u32 %v156, 4294901760
    %v158 = vsub.f32 %v156, %v157
    %v159 = vand.u32 %v158, 4294901760
    %160 = vmatmul.mubr.f32.gmra.mrb[0].mxu0 %v159
    %v161 = vpop.f32.mrb[0].mxu0
    %v162 = vadd.f32 %v73, %v161
    %v163 = vpop.f32.mrb[0].mxu0
    %164 = vdwg.mxu0
    %165 = vmatprep.subr.mxu0 0.0
    %v166 = vand.u32 %v44, 4294901760
    %v167 = vsub.f32 %v44, %v166
    %v168 = vand.u32 %v167, 4294901760
    %v169 = vsub.f32 %v167, %v168
    %v170 = vand.u32 %v169, 4294901760
    %171 = vmatpush1.msra.mxu0 %v170
    %172 = vmatprep.subr.mxu0 0.0
    %v173 = vand.u32 %v45, 4294901760
    %v174 = vsub.f32 %v45, %v173
    %v175 = vand.u32 %v174, 4294901760
    %v176 = vsub.f32 %v174, %v175
    %v177 = vand.u32 %v176, 4294901760
    %178 = vmatpush1.msra.mxu0 %v177
    %179 = vmatprep.subr.mxu0 0.0
    %v180 = vand.u32 %v46, 4294901760
    %v181 = vsub.f32 %v46, %v180
    %v182 = vand.u32 %v181, 4294901760
    %v183 = vsub.f32 %v181, %v182
    %v184 = vand.u32 %v183, 4294901760
    %185 = vmatpush1.msra.mxu0 %v184
    %186 = vmatprep.subr.mxu0 0.0
    %v187 = vand.u32 %v47, 4294901760
    %v188 = vsub.f32 %v47, %v187
    %v189 = vand.u32 %v188, 4294901760
    %v190 = vsub.f32 %v188, %v189
    %v191 = vand.u32 %v190, 4294901760
    %192 = vmatpush1.msra.mxu0 %v191
    %193 = vmatprep.subr.mxu0 0.0
    %v194 = vand.u32 %v48, 4294901760
    %v195 = vsub.f32 %v48, %v194
    %v196 = vand.u32 %v195, 4294901760
    %v197 = vsub.f32 %v195, %v196
    %v198 = vand.u32 %v197, 4294901760
    %199 = vmatpush1.msra.mxu0 %v198
    %200 = vmatprep.subr.mxu0 0.0
    %v201 = vand.u32 %v49, 4294901760
    %v202 = vsub.f32 %v49, %v201
    %v203 = vand.u32 %v202, 4294901760
    %v204 = vsub.f32 %v202, %v203
    %v205 = vand.u32 %v204, 4294901760
    %206 = vmatpush1.msra.mxu0 %v205
    %207 = vmatprep.subr.mxu0 0.0
    %v208 = vand.u32 %v50, 4294901760
    %v209 = vsub.f32 %v50, %v208
    %v210 = vand.u32 %v209, 4294901760
    %v211 = vsub.f32 %v209, %v210
    %v212 = vand.u32 %v211, 4294901760
    %213 = vmatpush1.msra.mxu0 %v212
    %214 = vmatprep.subr.mxu0 0.0
    %v215 = vand.u32 %v51, 4294901760
    %v216 = vsub.f32 %v51, %v215
    %v217 = vand.u32 %v216, 4294901760
    %v218 = vsub.f32 %v216, %v217
    %v219 = vand.u32 %v218, 4294901760
    %220 = vmatpush1.msra.mxu0 %v219
    %221 = vmatprep.subr.mxu0 0.0
    %v222 = vand.u32 %v52, 4294901760
    %v223 = vsub.f32 %v52, %v222
    %v224 = vand.u32 %v223, 4294901760
    %v225 = vsub.f32 %v223, %v224
    %v226 = vand.u32 %v225, 4294901760
    %227 = vmatpush1.msra.mxu0 %v226
    %228 = vmatprep.subr.mxu0 0.0
    %v229 = vand.u32 %v53, 4294901760
    %v230 = vsub.f32 %v53, %v229
    %v231 = vand.u32 %v230, 4294901760
    %v232 = vsub.f32 %v230, %v231
    %v233 = vand.u32 %v232, 4294901760
    %234 = vmatpush1.msra.mxu0 %v233
    %235 = vmatprep.subr.mxu0 0.0
    %v236 = vand.u32 %v54, 4294901760
    %v237 = vsub.f32 %v54, %v236
    %v238 = vand.u32 %v237, 4294901760
    %v239 = vsub.f32 %v237, %v238
    %v240 = vand.u32 %v239, 4294901760
    %241 = vmatpush1.msra.mxu0 %v240
    %242 = vmatprep.subr.mxu0 0.0
    %v243 = vand.u32 %v55, 4294901760
    %v244 = vsub.f32 %v55, %v243
    %v245 = vand.u32 %v244, 4294901760
    %v246 = vsub.f32 %v244, %v245
    %v247 = vand.u32 %v246, 4294901760
    %248 = vmatpush1.msra.mxu0 %v247
    %249 = vmatprep.subr.mxu0 0.0
    %v250 = vand.u32 %v56, 4294901760
    %v251 = vsub.f32 %v56, %v250
    %v252 = vand.u32 %v251, 4294901760
    %v253 = vsub.f32 %v251, %v252
    %v254 = vand.u32 %v253, 4294901760
    %255 = vmatpush1.msra.mxu0 %v254
    %256 = vmatprep.subr.mxu0 0.0
    %v257 = vand.u32 %v57, 4294901760
    %v258 = vsub.f32 %v57, %v257
    %v259 = vand.u32 %v258, 4294901760
    %v260 = vsub.f32 %v258, %v259
    %v261 = vand.u32 %v260, 4294901760
    %262 = vmatpush1.msra.mxu0 %v261
    %263 = vmatprep.subr.mxu0 0.0
    %v264 = vand.u32 %v58, 4294901760
    %v265 = vsub.f32 %v58, %v264
    %v266 = vand.u32 %v265, 4294901760
    %v267 = vsub.f32 %v265, %v266
    %v268 = vand.u32 %v267, 4294901760
    %269 = vmatpush1.msra.mxu0 %v268
    %270 = vmatprep.subr.mxu0 0.0
    %v271 = vand.u32 %v59, 4294901760
    %v272 = vsub.f32 %v59, %v271
    %v273 = vand.u32 %v272, 4294901760
    %v274 = vsub.f32 %v272, %v273
    %v275 = vand.u32 %v274, 4294901760
    %276 = vmatpush1.msra.mxu0 %v275
    %277 = vmatprep.subr.mxu0 0.0
    %278 = vmatpush1.msra.mxu0 0.0
    %279 = vmatprep.subr.mxu0 0.0
    %280 = vmatpush1.msra.mxu0 0.0
    %281 = vmatprep.subr.mxu0 0.0
    %282 = vmatpush1.msra.mxu0 0.0
    %283 = vmatprep.subr.mxu0 0.0
    %284 = vmatpush1.msra.mxu0 0.0
    %285 = vmatprep.subr.mxu0 0.0
    %286 = vmatpush1.msra.mxu0 0.0
    %287 = vmatprep.subr.mxu0 0.0
    %288 = vmatpush1.msra.mxu0 0.0
    %289 = vmatprep.subr.mxu0 0.0
    %290 = vmatpush1.msra.mxu0 0.0
    %291 = vmatprep.subr.mxu0 0.0
    %292 = vmatpush1.msra.mxu0 0.0
    %293 = vmatprep.subr.mxu0 0.0
    %294 = vmatpush1.msra.mxu0 0.0
    %295 = vmatprep.subr.mxu0 0.0
    %296 = vmatpush1.msra.mxu0 0.0
    %297 = vmatprep.subr.mxu0 0.0
    %298 = vmatpush1.msra.mxu0 0.0
    %299 = vmatprep.subr.mxu0 0.0
    %300 = vmatpush1.msra.mxu0 0.0
    %301 = vmatprep.subr.mxu0 0.0
    %302 = vmatpush1.msra.mxu0 0.0
    %303 = vmatprep.subr.mxu0 0.0
    %304 = vmatpush1.msra.mxu0 0.0
    %305 = vmatprep.subr.mxu0 0.0
    %306 = vmatpush1.msra.mxu0 0.0
    %307 = vmatprep.subr.mxu0 0.0
    %308 = vmatpush1.msra.mxu0 0.0
    %309 = vmatprep.mubr.f32.mxu0 0.0
    %v310 = vand.u32 %v43, 4294901760
    %311 = vmatmul.mubr.f32.gmra.mrb[0].mxu0 %v310
    %v312 = vpop.f32.mrb[0].mxu0
    %v313 = vadd.f32 %v162, %v312
    %v314 = vpop.f32.mrb[0].mxu0
    %315 = vdwg.mxu0
    %316 = vmatprep.subr.mxu0 0.0
    %v317 = vand.u32 %v44, 4294901760
    %v318 = vsub.f32 %v44, %v317
    %319 = vmatpush1.msra.mxu0 %v318
    %320 = vmatprep.subr.mxu0 0.0
    %v321 = vand.u32 %v45, 4294901760
    %v322 = vsub.f32 %v45, %v321
    %323 = vmatpush1.msra.mxu0 %v322
    %324 = vmatprep.subr.mxu0 0.0
    %v325 = vand.u32 %v46, 4294901760
    %v326 = vsub.f32 %v46, %v325
    %327 = vmatpush1.msra.mxu0 %v326
    %328 = vmatprep.subr.mxu0 0.0
    %v329 = vand.u32 %v47, 4294901760
    %v330 = vsub.f32 %v47, %v329
    %331 = vmatpush1.msra.mxu0 %v330
    %332 = vmatprep.subr.mxu0 0.0
    %v333 = vand.u32 %v48, 4294901760
    %v334 = vsub.f32 %v48, %v333
    %335 = vmatpush1.msra.mxu0 %v334
    %336 = vmatprep.subr.mxu0 0.0
    %v337 = vand.u32 %v49, 4294901760
    %v338 = vsub.f32 %v49, %v337
    %339 = vmatpush1.msra.mxu0 %v338
    %340 = vmatprep.subr.mxu0 0.0
    %v341 = vand.u32 %v50, 4294901760
    %v342 = vsub.f32 %v50, %v341
    %343 = vmatpush1.msra.mxu0 %v342
    %344 = vmatprep.subr.mxu0 0.0
    %v345 = vand.u32 %v51, 4294901760
    %v346 = vsub.f32 %v51, %v345
    %347 = vmatpush1.msra.mxu0 %v346
    %348 = vmatprep.subr.mxu0 0.0
    %v349 = vand.u32 %v52, 4294901760
    %v350 = vsub.f32 %v52, %v349
    %351 = vmatpush1.msra.mxu0 %v350
    %352 = vmatprep.subr.mxu0 0.0
    %v353 = vand.u32 %v53, 4294901760
    %v354 = vsub.f32 %v53, %v353
    %355 = vmatpush1.msra.mxu0 %v354
    %356 = vmatprep.subr.mxu0 0.0
    %v357 = vand.u32 %v54, 4294901760
    %v358 = vsub.f32 %v54, %v357
    %359 = vmatpush1.msra.mxu0 %v358
    %360 = vmatprep.subr.mxu0 0.0
    %v361 = vand.u32 %v55, 4294901760
    %v362 = vsub.f32 %v55, %v361
    %363 = vmatpush1.msra.mxu0 %v362
    %364 = vmatprep.subr.mxu0 0.0
    %v365 = vand.u32 %v56, 4294901760
    %v366 = vsub.f32 %v56, %v365
    %367 = vmatpush1.msra.mxu0 %v366
    %368 = vmatprep.subr.mxu0 0.0
    %v369 = vand.u32 %v57, 4294901760
    %v370 = vsub.f32 %v57, %v369
    %371 = vmatpush1.msra.mxu0 %v370
    %372 = vmatprep.subr.mxu0 0.0
    %v373 = vand.u32 %v58, 4294901760
    %v374 = vsub.f32 %v58, %v373
    %375 = vmatpush1.msra.mxu0 %v374
    %376 = vmatprep.subr.mxu0 0.0
    %v377 = vand.u32 %v59, 4294901760
    %v378 = vsub.f32 %v59, %v377
    %379 = vmatpush1.msra.mxu0 %v378
    %380 = vmatprep.subr.mxu0 0.0
    %381 = vmatpush1.msra.mxu0 0.0
    %382 = vmatprep.subr.mxu0 0.0
    %383 = vmatpush1.msra.mxu0 0.0
    %384 = vmatprep.subr.mxu0 0.0
    %385 = vmatpush1.msra.mxu0 0.0
    %386 = vmatprep.subr.mxu0 0.0
    %387 = vmatpush1.msra.mxu0 0.0
    %388 = vmatprep.subr.mxu0 0.0
    %389 = vmatpush1.msra.mxu0 0.0
    %390 = vmatprep.subr.mxu0 0.0
    %391 = vmatpush1.msra.mxu0 0.0
    %392 = vmatprep.subr.mxu0 0.0
    %393 = vmatpush1.msra.mxu0 0.0
    %394 = vmatprep.subr.mxu0 0.0
    %395 = vmatpush1.msra.mxu0 0.0
    %396 = vmatprep.subr.mxu0 0.0
    %397 = vmatpush1.msra.mxu0 0.0
    %398 = vmatprep.subr.mxu0 0.0
    %399 = vmatpush1.msra.mxu0 0.0
    %400 = vmatprep.subr.mxu0 0.0
    %401 = vmatpush1.msra.mxu0 0.0
    %402 = vmatprep.subr.mxu0 0.0
    %403 = vmatpush1.msra.mxu0 0.0
    %404 = vmatprep.subr.mxu0 0.0
    %405 = vmatpush1.msra.mxu0 0.0
    %406 = vmatprep.subr.mxu0 0.0
    %407 = vmatpush1.msra.mxu0 0.0
    %408 = vmatprep.subr.mxu0 0.0
    %409 = vmatpush1.msra.mxu0 0.0
    %410 = vmatprep.subr.mxu0 0.0
    %411 = vmatpush1.msra.mxu0 0.0
    %412 = vmatprep.mubr.f32.mxu0 0.0
    %v413 = vand.u32 %v43, 4294901760
    %v414 = vsub.f32 %v43, %v413
    %415 = vmatmul.mubr.f32.gmra.mrb[0].mxu0 %v414
    %v416 = vpop.f32.mrb[0].mxu0
    %v417 = vadd.f32 %v313, %v416
    %v418 = vpop.f32.mrb[0].mxu0
    %419 = vdwg.mxu0
    %420 = vmatprep.subr.mxu0 0.0
    %v421 = vand.u32 %v44, 4294901760
    %422 = vmatpush1.msra.mxu0 %v421
    %423 = vmatprep.subr.mxu0 0.0
    %v424 = vand.u32 %v45, 4294901760
    %425 = vmatpush1.msra.mxu0 %v424
    %426 = vmatprep.subr.mxu0 0.0
    %v427 = vand.u32 %v46, 4294901760
    %428 = vmatpush1.msra.mxu0 %v427
    %429 = vmatprep.subr.mxu0 0.0
    %v430 = vand.u32 %v47, 4294901760
    %431 = vmatpush1.msra.mxu0 %v430
    %432 = vmatprep.subr.mxu0 0.0
    %v433 = vand.u32 %v48, 4294901760
    %434 = vmatpush1.msra.mxu0 %v433
    %435 = vmatprep.subr.mxu0 0.0
    %v436 = vand.u32 %v49, 4294901760
    %437 = vmatpush1.msra.mxu0 %v436
    %438 = vmatprep.subr.mxu0 0.0
    %v439 = vand.u32 %v50, 4294901760
    %440 = vmatpush1.msra.mxu0 %v439
    %441 = vmatprep.subr.mxu0 0.0
    %v442 = vand.u32 %v51, 4294901760
    %443 = vmatpush1.msra.mxu0 %v442
    %444 = vmatprep.subr.mxu0 0.0
    %v445 = vand.u32 %v52, 4294901760
    %446 = vmatpush1.msra.mxu0 %v445
    %447 = vmatprep.subr.mxu0 0.0
    %v448 = vand.u32 %v53, 4294901760
    %449 = vmatpush1.msra.mxu0 %v448
    %450 = vmatprep.subr.mxu0 0.0
    %v451 = vand.u32 %v54, 4294901760
    %452 = vmatpush1.msra.mxu0 %v451
    %453 = vmatprep.subr.mxu0 0.0
    %v454 = vand.u32 %v55, 4294901760
    %455 = vmatpush1.msra.mxu0 %v454
    %456 = vmatprep.subr.mxu0 0.0
    %v457 = vand.u32 %v56, 4294901760
    %458 = vmatpush1.msra.mxu0 %v457
    %459 = vmatprep.subr.mxu0 0.0
    %v460 = vand.u32 %v57, 4294901760
    %461 = vmatpush1.msra.mxu0 %v460
    %462 = vmatprep.subr.mxu0 0.0
    %v463 = vand.u32 %v58, 4294901760
    %464 = vmatpush1.msra.mxu0 %v463
    %465 = vmatprep.subr.mxu0 0.0
    %v466 = vand.u32 %v59, 4294901760
    %467 = vmatpush1.msra.mxu0 %v466
    %468 = vmatprep.subr.mxu0 0.0
    %469 = vmatpush1.msra.mxu0 0.0
    %470 = vmatprep.subr.mxu0 0.0
    %471 = vmatpush1.msra.mxu0 0.0
    %472 = vmatprep.subr.mxu0 0.0
    %473 = vmatpush1.msra.mxu0 0.0
    %474 = vmatprep.subr.mxu0 0.0
    %475 = vmatpush1.msra.mxu0 0.0
    %476 = vmatprep.subr.mxu0 0.0
    %477 = vmatpush1.msra.mxu0 0.0
    %478 = vmatprep.subr.mxu0 0.0
    %479 = vmatpush1.msra.mxu0 0.0
    %480 = vmatprep.subr.mxu0 0.0
    %481 = vmatpush1.msra.mxu0 0.0
    %482 = vmatprep.subr.mxu0 0.0
    %483 = vmatpush1.msra.mxu0 0.0
    %484 = vmatprep.subr.mxu0 0.0
    %485 = vmatpush1.msra.mxu0 0.0
    %486 = vmatprep.subr.mxu0 0.0
    %487 = vmatpush1.msra.mxu0 0.0
    %488 = vmatprep.subr.mxu0 0.0
    %489 = vmatpush1.msra.mxu0 0.0
    %490 = vmatprep.subr.mxu0 0.0
    %491 = vmatpush1.msra.mxu0 0.0
    %492 = vmatprep.subr.mxu0 0.0
    %493 = vmatpush1.msra.mxu0 0.0
    %494 = vmatprep.subr.mxu0 0.0
    %495 = vmatpush1.msra.mxu0 0.0
    %496 = vmatprep.subr.mxu0 0.0
    %497 = vmatpush1.msra.mxu0 0.0
    %498 = vmatprep.subr.mxu0 0.0
    %499 = vmatpush1.msra.mxu0 0.0
    %500 = vmatprep.mubr.f32.mxu0 0.0
    %v501 = vand.u32 %v43, 4294901760
    %v502 = vsub.f32 %v43, %v501
    %v503 = vand.u32 %v502, 4294901760
    %504 = vmatmul.mubr.f32.gmra.mrb[0].mxu0 %v503
    %v505 = vpop.f32.mrb[0].mxu0
    %v506 = vadd.f32 %v417, %v505
    %v507 = vpop.f32.mrb[0].mxu0
    %508 = vdwg.mxu0
    %509 = vmatprep.subr.mxu0 0.0
    %v510 = vand.u32 %v44, 4294901760
    %v511 = vsub.f32 %v44, %v510
    %v512 = vand.u32 %v511, 4294901760
    %513 = vmatpush1.msra.mxu0 %v512
    %514 = vmatprep.subr.mxu0 0.0
    %v515 = vand.u32 %v45, 4294901760
    %v516 = vsub.f32 %v45, %v515
    %v517 = vand.u32 %v516, 4294901760
    %518 = vmatpush1.msra.mxu0 %v517
    %519 = vmatprep.subr.mxu0 0.0
    %v520 = vand.u32 %v46, 4294901760
    %v521 = vsub.f32 %v46, %v520
    %v522 = vand.u32 %v521, 4294901760
    %523 = vmatpush1.msra.mxu0 %v522
    %524 = vmatprep.subr.mxu0 0.0
    %v525 = vand.u32 %v47, 4294901760
    %v526 = vsub.f32 %v47, %v525
    %v527 = vand.u32 %v526, 4294901760
    %528 = vmatpush1.msra.mxu0 %v527
    %529 = vmatprep.subr.mxu0 0.0
    %v530 = vand.u32 %v48, 4294901760
    %v531 = vsub.f32 %v48, %v530
    %v532 = vand.u32 %v531, 4294901760
    %533 = vmatpush1.msra.mxu0 %v532
    %534 = vmatprep.subr.mxu0 0.0
    %v535 = vand.u32 %v49, 4294901760
    %v536 = vsub.f32 %v49, %v535
    %v537 = vand.u32 %v536, 4294901760
    %538 = vmatpush1.msra.mxu0 %v537
    %539 = vmatprep.subr.mxu0 0.0
    %v540 = vand.u32 %v50, 4294901760
    %v541 = vsub.f32 %v50, %v540
    %v542 = vand.u32 %v541, 4294901760
    %543 = vmatpush1.msra.mxu0 %v542
    %544 = vmatprep.subr.mxu0 0.0
    %v545 = vand.u32 %v51, 4294901760
    %v546 = vsub.f32 %v51, %v545
    %v547 = vand.u32 %v546, 4294901760
    %548 = vmatpush1.msra.mxu0 %v547
    %549 = vmatprep.subr.mxu0 0.0
    %v550 = vand.u32 %v52, 4294901760
    %v551 = vsub.f32 %v52, %v550
    %v552 = vand.u32 %v551, 4294901760
    %553 = vmatpush1.msra.mxu0 %v552
    %554 = vmatprep.subr.mxu0 0.0
    %v555 = vand.u32 %v53, 4294901760
    %v556 = vsub.f32 %v53, %v555
    %v557 = vand.u32 %v556, 4294901760
    %558 = vmatpush1.msra.mxu0 %v557
    %559 = vmatprep.subr.mxu0 0.0
    %v560 = vand.u32 %v54, 4294901760
    %v561 = vsub.f32 %v54, %v560
    %v562 = vand.u32 %v561, 4294901760
    %563 = vmatpush1.msra.mxu0 %v562
    %564 = vmatprep.subr.mxu0 0.0
    %v565 = vand.u32 %v55, 4294901760
    %v566 = vsub.f32 %v55, %v565
    %v567 = vand.u32 %v566, 4294901760
    %568 = vmatpush1.msra.mxu0 %v567
    %569 = vmatprep.subr.mxu0 0.0
    %v570 = vand.u32 %v56, 4294901760
    %v571 = vsub.f32 %v56, %v570
    %v572 = vand.u32 %v571, 4294901760
    %573 = vmatpush1.msra.mxu0 %v572
    %574 = vmatprep.subr.mxu0 0.0
    %v575 = vand.u32 %v57, 4294901760
    %v576 = vsub.f32 %v57, %v575
    %v577 = vand.u32 %v576, 4294901760
    %578 = vmatpush1.msra.mxu0 %v577
    %579 = vmatprep.subr.mxu0 0.0
    %v580 = vand.u32 %v58, 4294901760
    %v581 = vsub.f32 %v58, %v580
    %v582 = vand.u32 %v581, 4294901760
    %583 = vmatpush1.msra.mxu0 %v582
    %584 = vmatprep.subr.mxu0 0.0
    %v585 = vand.u32 %v59, 4294901760
    %v586 = vsub.f32 %v59, %v585
    %v587 = vand.u32 %v586, 4294901760
    %588 = vmatpush1.msra.mxu0 %v587
    %589 = vmatprep.subr.mxu0 0.0
    %590 = vmatpush1.msra.mxu0 0.0
    %591 = vmatprep.subr.mxu0 0.0
    %592 = vmatpush1.msra.mxu0 0.0
    %593 = vmatprep.subr.mxu0 0.0
    %594 = vmatpush1.msra.mxu0 0.0
    %595 = vmatprep.subr.mxu0 0.0
    %596 = vmatpush1.msra.mxu0 0.0
    %597 = vmatprep.subr.mxu0 0.0
    %598 = vmatpush1.msra.mxu0 0.0
    %599 = vmatprep.subr.mxu0 0.0
    %600 = vmatpush1.msra.mxu0 0.0
    %601 = vmatprep.subr.mxu0 0.0
    %602 = vmatpush1.msra.mxu0 0.0
    %603 = vmatprep.subr.mxu0 0.0
    %604 = vmatpush1.msra.mxu0 0.0
    %605 = vmatprep.subr.mxu0 0.0
    %606 = vmatpush1.msra.mxu0 0.0
    %607 = vmatprep.subr.mxu0 0.0
    %608 = vmatpush1.msra.mxu0 0.0
    %609 = vmatprep.subr.mxu0 0.0
    %610 = vmatpush1.msra.mxu0 0.0
    %611 = vmatprep.subr.mxu0 0.0
    %612 = vmatpush1.msra.mxu0 0.0
    %613 = vmatprep.subr.mxu0 0.0
    %614 = vmatpush1.msra.mxu0 0.0
    %615 = vmatprep.subr.mxu0 0.0
    %616 = vmatpush1.msra.mxu0 0.0
    %617 = vmatprep.subr.mxu0 0.0
    %618 = vmatpush1.msra.mxu0 0.0
    %619 = vmatprep.subr.mxu0 0.0
    %620 = vmatpush1.msra.mxu0 0.0
    %621 = vmatprep.mubr.f32.mxu0 0.0
    %v622 = vand.u32 %v43, 4294901760
    %623 = vmatmul.mubr.f32.gmra.mrb[0].mxu0 %v622
    %v624 = vpop.f32.mrb[0].mxu0
    %v625 = vadd.f32 %v506, %v624
    %v626 = vpop.f32.mrb[0].mxu0
    %627 = vdwg.mxu0
    %628 = vmatprep.subr.mxu0 0.0
    %v629 = vand.u32 %v44, 4294901760
    %630 = vmatpush1.msra.mxu0 %v629
    %631 = vmatprep.subr.mxu0 0.0
    %v632 = vand.u32 %v45, 4294901760
    %633 = vmatpush1.msra.mxu0 %v632
    %634 = vmatprep.subr.mxu0 0.0
    %v635 = vand.u32 %v46, 4294901760
    %636 = vmatpush1.msra.mxu0 %v635
    %637 = vmatprep.subr.mxu0 0.0
    %v638 = vand.u32 %v47, 4294901760
    %639 = vmatpush1.msra.mxu0 %v638
    %640 = vmatprep.subr.mxu0 0.0
    %v641 = vand.u32 %v48, 4294901760
    %642 = vmatpush1.msra.mxu0 %v641
    %643 = vmatprep.subr.mxu0 0.0
    %v644 = vand.u32 %v49, 4294901760
    %645 = vmatpush1.msra.mxu0 %v644
    %646 = vmatprep.subr.mxu0 0.0
    %v647 = vand.u32 %v50, 4294901760
    %648 = vmatpush1.msra.mxu0 %v647
    %649 = vmatprep.subr.mxu0 0.0
    %v650 = vand.u32 %v51, 4294901760
    %651 = vmatpush1.msra.mxu0 %v650
    %652 = vmatprep.subr.mxu0 0.0
    %v653 = vand.u32 %v52, 4294901760
    %654 = vmatpush1.msra.mxu0 %v653
    %655 = vmatprep.subr.mxu0 0.0
    %v656 = vand.u32 %v53, 4294901760
    %657 = vmatpush1.msra.mxu0 %v656
    %658 = vmatprep.subr.mxu0 0.0
    %v659 = vand.u32 %v54, 4294901760
    %660 = vmatpush1.msra.mxu0 %v659
    %661 = vmatprep.subr.mxu0 0.0
    %v662 = vand.u32 %v55, 4294901760
    %663 = vmatpush1.msra.mxu0 %v662
    %664 = vmatprep.subr.mxu0 0.0
    %v665 = vand.u32 %v56, 4294901760
    %666 = vmatpush1.msra.mxu0 %v665
    %667 = vmatprep.subr.mxu0 0.0
    %v668 = vand.u32 %v57, 4294901760
    %669 = vmatpush1.msra.mxu0 %v668
    %670 = vmatprep.subr.mxu0 0.0
    %v671 = vand.u32 %v58, 4294901760
    %672 = vmatpush1.msra.mxu0 %v671
    %673 = vmatprep.subr.mxu0 0.0
    %v674 = vand.u32 %v59, 4294901760
    %675 = vmatpush1.msra.mxu0 %v674
    %676 = vmatprep.subr.mxu0 0.0
    %677 = vmatpush1.msra.mxu0 0.0
    %678 = vmatprep.subr.mxu0 0.0
    %679 = vmatpush1.msra.mxu0 0.0
    %680 = vmatprep.subr.mxu0 0.0
    %681 = vmatpush1.msra.mxu0 0.0
    %682 = vmatprep.subr.mxu0 0.0
    %683 = vmatpush1.msra.mxu0 0.0
    %684 = vmatprep.subr.mxu0 0.0
    %685 = vmatpush1.msra.mxu0 0.0
    %686 = vmatprep.subr.mxu0 0.0
    %687 = vmatpush1.msra.mxu0 0.0
    %688 = vmatprep.subr.mxu0 0.0
    %689 = vmatpush1.msra.mxu0 0.0
    %690 = vmatprep.subr.mxu0 0.0
    %691 = vmatpush1.msra.mxu0 0.0
    %692 = vmatprep.subr.mxu0 0.0
    %693 = vmatpush1.msra.mxu0 0.0
    %694 = vmatprep.subr.mxu0 0.0
    %695 = vmatpush1.msra.mxu0 0.0
    %696 = vmatprep.subr.mxu0 0.0
    %697 = vmatpush1.msra.mxu0 0.0
    %698 = vmatprep.subr.mxu0 0.0
    %699 = vmatpush1.msra.mxu0 0.0
    %700 = vmatprep.subr.mxu0 0.0
    %701 = vmatpush1.msra.mxu0 0.0
    %702 = vmatprep.subr.mxu0 0.0
    %703 = vmatpush1.msra.mxu0 0.0
    %704 = vmatprep.subr.mxu0 0.0
    %705 = vmatpush1.msra.mxu0 0.0
    %706 = vmatprep.subr.mxu0 0.0
    %707 = vmatpush1.msra.mxu0 0.0
    %708 = vmatprep.mubr.f32.mxu0 0.0
    %v709 = vand.u32 %v43, 4294901760
    %710 = vmatmul.mubr.f32.gmra.mrb[0].mxu0 %v709
    %v711 = vpop.f32.mrb[0].mxu0
    %v712 = vadd.f32 %v625, %v711
    %v713 = vpop.f32.mrb[0].mxu0
    %714 = vdwg.mxu0
    %715 = vst [vmem:[#allocation5] sm:$0xff] %v712
    // Predicated region
    $region18: #{tpu_custom_call.1} parent=1 // pred_check
      _
    $region19: #{tpu_custom_call.1} parent=1 // pred_check_branch
      %717 = sbr.rel (0) target = $region21
    $region20: #{tpu_custom_call.1} parent=1 // pred_region
      %s719 = ssub.s32 128, 128
      %720 = vsyncadd [#allocation4], %s719
      %s722 = sshll.u32 [#allocation5], 4
      %s723 = int_to_ptr.vmem [resolvable:$true] %s722
      %725 = dma.vmem_to_hbm [thread:$0]  %s723, 128, %s3, [#allocation4]
    $region21: #{tpu_custom_call.1} parent=1 // pred_fallthru
      _
    // Predicated region
    $region22: #{tpu_custom_call.1} parent=1 // pred_check
      _
    $region23: #{tpu_custom_call.1} parent=1 // pred_check_branch
      %727 = sbr.rel (0) target = $region25
    $region24: #{tpu_custom_call.1} parent=1 // pred_region
      %728 = dma.done [#allocation4], 128
    $region25: #{tpu_custom_call.1} parent=1 // pred_fallthru
      _
    %729 = vsyncpa [#allocation3], 1
    %730 = vsyncpa [#allocation4], 1

</llo_original>
